<compile_context>
chip_gen: v6e
topology: v6e:2x2x1
jax: 0.10.0
libtpu: 0.0.40
codegen_flags: <defaults>
</compile_context>

<pallas_src>
import jax
import jax.numpy as jnp
from jax.experimental import pallas as pl
from jax.experimental.pallas import tpu as pltpu

LANES = 128
MAX_BLOCK_BYTES = 4 * 1024 * 1024     # ~4 MiB per block (in+out, 2x buffered ≈ 16 MiB VMEM)
MIN_PALLAS_BYTES = 512 * 1024         # below this, plain XLA wins (dispatch + repack overhead)


def _cdiv(a, b):
    return -(-a // b)


def _round_up(a, b):
    return _cdiv(a, b) * b


def bias_layer_kernel(ab_ref, x_ref, o_ref):
    # ab_ref (SMEM, f32): ab_ref[0] = alpha + 1, ab_ref[1] = beta if bias else 0
    o_ref[...] = (x_ref[...] * ab_ref[0] + ab_ref[1]).astype(o_ref.dtype)


def bias_layer_forward(x, alpha, beta, bias=True, use_pallas=None):
    """JAX/Pallas equivalent of BiasLayer.forward.

    `bias` must be a static Python bool (it is in the PyTorch module as well).
    `use_pallas=None` auto-dispatches: tiny tensors use plain jnp, large ones the kernel.
    """
    x = jnp.asarray(x)
    orig_shape = x.shape
    orig_dtype = x.dtype
    n = x.size
    itemsize = orig_dtype.itemsize

    # Fold "+1" and the static bias flag into the packed scalars at trace time.
    scale = jnp.asarray(alpha, dtype=jnp.float32).reshape(-1)[:1] + 1.0
    shift = jnp.asarray(beta, dtype=jnp.float32).reshape(-1)[:1]
    if not bias:
        shift = jnp.zeros_like(shift)

    if use_pallas is None:
        use_pallas = n * itemsize >= MIN_PALLAS_BYTES
    if n == 0 or not use_pallas:
        # Small path: let XLA fuse this FMA into its neighbors.
        return (x * scale[0] + shift[0]).astype(orig_dtype)

    # ---- lane-dense repack: flatten -> (rows, 128), true row count (no block round-up) ----
    pack = max(8, 32 // itemsize)               # sublane packing: 8 f32, 16 bf16, 32 int8
    rows = _cdiv(n, LANES)

    max_block_rows = MAX_BLOCK_BYTES // (LANES * itemsize)   # multiple of `pack` by construction
    # Keep >= 2 blocks when possible so the "parallel" axis can shard across v7x's 2 TCs.
    row_block = min(max_block_rows, _round_up(_cdiv(rows, 2), pack))
    row_block = max(row_block, pack)
    num_blocks = _cdiv(rows, row_block)          # last grid block may be partial

    flat = x.reshape(-1)
    pad = rows * LANES - n                       # minimal pad: < 128 elements, only if n % 128 != 0
    if pad:
        flat = jnp.concatenate([flat, jnp.zeros((pad,), dtype=flat.dtype)])
    x2d = flat.reshape(rows, LANES)

    ab = jnp.concatenate([scale, shift])         # (2,) float32, lives in SMEM

    out2d = pl.pallas_call(
        bias_layer_kernel,
        out_shape=jax.ShapeDtypeStruct((rows, LANES), orig_dtype),
        grid=(num_blocks,),
        in_specs=[
            pl.BlockSpec(memory_space=pltpu.MemorySpace.SMEM),      # packed (alpha+1, beta)
            pl.BlockSpec((row_block, LANES), lambda i: (i, 0)),     # x tile
        ],
        out_specs=pl.BlockSpec((row_block, LANES), lambda i: (i, 0)),
        compiler_params=pltpu.CompilerParams(
            dimension_semantics=("parallel",),
            vmem_limit_bytes=32 * 1024 * 1024,
        ),
    )(ab, x2d)

    out = out2d.reshape(-1)
    if pad:
        out = out[:n]
    return out.reshape(orig_shape)


def reference_forward(x, alpha, beta, bias=True):
    ret = (alpha + 1.0) * x
    if bias:
        ret = ret + beta
    return ret


if __name__ == "__main__":
    key = jax.random.PRNGKey(0)
    kx, ka, kb, kr, kl = jax.random.split(key, 5)

    # nn.Parameter(torch.zeros(1)) initializes to 0; use non-trivial values so the test is meaningful.
    alpha = jax.random.normal(ka, (1,), dtype=jnp.float32) * 0.1
    beta = jax.random.normal(kb, (1,), dtype=jnp.float32) * 0.1

    # 1) Module-implied small activation; force the Pallas path so the kernel itself runs.
    x = jax.random.normal(kx, (2, 4, 16, 16), dtype=jnp.float32)
    out = jax.block_until_ready(bias_layer_forward(x, alpha, beta, bias=True, use_pallas=True))
    ref = reference_forward(x, alpha, beta, bias=True)
    assert out.shape == x.shape and out.dtype == x.dtype
    assert jnp.allclose(out, ref, atol=1e-5, rtol=1e-5), "mismatch vs reference (bias=True)"

    out_nb = jax.block_until_ready(bias_layer_forward(x, alpha, beta, bias=False, use_pallas=True))
    ref_nb = reference_forward(x, alpha, beta, bias=False)
    assert jnp.allclose(out_nb, ref_nb, atol=1e-5, rtol=1e-5), "mismatch vs reference (bias=False)"

    # 2) Non-128-aligned size: exercises the minimal tail pad + partial trailing grid block.
    xr = jax.random.normal(kr, (3, 777), dtype=jnp.float32)
    outr = jax.block_until_ready(bias_layer_forward(xr, alpha, beta, bias=True, use_pallas=True))
    refr = reference_forward(xr, alpha, beta, bias=True)
    assert outr.shape == xr.shape
    assert jnp.allclose(outr, refr, atol=1e-5, rtol=1e-5), "mismatch vs reference (ragged)"

    # 3) Larger activation: auto-dispatch picks Pallas, multiple grid blocks, partial last block,
    #    no wrapper padding (size is a multiple of 128).
    xl = jax.random.normal(kl, (6, 512, 700), dtype=jnp.float32)
    outl = jax.block_until_ready(bias_layer_forward(xl, alpha, beta, bias=True))
    refl = reference_forward(xl, alpha, beta, bias=True)
    assert jnp.allclose(outl, refl, atol=1e-5, rtol=1e-5), "mismatch vs reference (multi-block)"

    # 4) Auto small path (plain jnp fallback) stays consistent with the kernel path.
    out_auto = jax.block_until_ready(bias_layer_forward(x, alpha, beta, bias=True))
    assert jnp.allclose(out_auto, ref, atol=1e-5, rtol=1e-5), "mismatch vs reference (auto small)"

    print("KERNEL_OK")
</pallas_src>

<mosaic_0001>
module attributes {stable_mosaic.version = 11 : i64} {
  func.func @bias_layer_kernel(%arg0: i32, %arg1: memref<2xf32, #tpu.memory_space<smem>>, %arg2: memref<8x128xf32, #tpu.memory_space<vmem>>, %arg3: memref<8x128xf32, #tpu.memory_space<vmem>>) attributes {dimension_semantics = [#tpu.dimension_semantics<parallel>], iteration_bounds = array<i64: 2>, scalar_prefetch = 0 : i64, scratch_operands = 0 : i64, tpu.core_type = #tpu.core_type<tc>, window_params = [{transform_indices = @transform_0, window_bounds = array<i64: 2>}, {transform_indices = @transform_1, window_bounds = array<i64: 8, 128>}, {transform_indices = @transform_2, window_bounds = array<i64: 8, 128>}]} {
    %c0 = arith.constant 0 : index
    %c0_0 = arith.constant 0 : index
    %0 = vector.load %arg2[%c0, %c0_0] : memref<8x128xf32, #tpu.memory_space<vmem>>, vector<8x128xf32>
    %c0_1 = arith.constant 0 : index
    %1 = memref.load %arg1[%c0_1] : memref<2xf32, #tpu.memory_space<smem>>
    %2 = vector.broadcast %1 : f32 to vector<8x128xf32>
    %3 = arith.mulf %0, %2 : vector<8x128xf32>
    %c1 = arith.constant 1 : index
    %4 = memref.load %arg1[%c1] : memref<2xf32, #tpu.memory_space<smem>>
    %5 = vector.broadcast %4 : f32 to vector<8x128xf32>
    %6 = arith.addf %3, %5 : vector<8x128xf32>
    %c0_2 = arith.constant 0 : index
    %c0_3 = arith.constant 0 : index
    %7 = vector.load %arg3[%c0_2, %c0_3] : memref<8x128xf32, #tpu.memory_space<vmem>>, vector<8x128xf32>
    tpu.vector_store %arg3[%c0_2, %c0_3], %6 {strides = array<i32>} : memref<8x128xf32, #tpu.memory_space<vmem>>, vector<8x128xf32>,
    return
  }
  func.func @transform_0(%arg0: i32) -> i32 {
    %c0_i32 = arith.constant 0 : i32
    %c0_i32_0 = arith.constant 0 : i32
    return %c0_i32 : i32
  }
  func.func @transform_1(%arg0: i32) -> (i32, i32) {
    %c0_i32 = arith.constant 0 : i32
    %c0_i32_0 = arith.constant 0 : i32
    return %arg0, %c0_i32 : i32, i32
  }
  func.func @transform_2(%arg0: i32) -> (i32, i32) {
    %c0_i32 = arith.constant 0 : i32
    %c0_i32_0 = arith.constant 0 : i32
    return %arg0, %c0_i32 : i32, i32
  }
}

</mosaic_0001>

<llo_original>
// kernel: tpu_custom_call.1
$region0: #{tpu_custom_call.1}
  #allocation0 [shape = 'u32[]', space=smem, size = 0x4, offset = 0x4, fixed_abs, tag = 'smem constant byte address 0x4 - core index']
  #allocation1 [shape = 'u32[144,128]{1,0:T(1,128)}', space=vmem, size = 0x12000, scoped, tag = 'internal scratch']
  %s0 = inlined_call_operand.hbm [shape: f32[2], index: 0, kind: input, shape index: {}]
  %s1 = inlined_call_operand.hbm [shape: f32[16,128], index: 1, kind: input, shape index: {}]
  %s2 = inlined_call_operand.hbm [shape: f32[16,128], index: 2, kind: output, shape index: {}]
  %s3 = sld [smem:[#allocation0]]
  $region49: #{tpu_custom_call.1} parent=0
    _
  %s5 = ssub.s32 1, %s3
  %s6 = scalar_select 0, %s5, %s3
  $region1: #{tpu_custom_call.1} parent=0
    #allocation2 [shape = 'u8[512]{0}', space=smem, size = 0x200, scoped, tag = 'input window, operand 0, single buffered']
    #allocation3 [shape = 's32[2]{0}', space=sflag, size = 0x8, scoped, tag = 'scoped memory for tpu_custom_call.1']
    #allocation4 [shape = 's32[2]{0}', space=sflag, size = 0x8, scoped, tag = 'scoped memory for tpu_custom_call.1']
    #allocation5 [shape = 's32[2]{0}', space=sflag, size = 0x8, scoped, tag = 'scoped memory for tpu_custom_call.1']
    #allocation6 [shape = 'u8[8192]{0}', space=vmem, size = 0x2000, scoped, tag = 'input window, operand 1']
    #allocation7 [shape = 'u8[8192]{0}', space=vmem, size = 0x2000, scoped, tag = 'output window, operand 0']
    %7 = vsyncpa [#allocation5], 0
    %8 = vsyncpa [#allocation3], 0
    %s9 = scalar_lea.sflag [#allocation3], 1
    %10 = vsyncpa %s9, 0
    %11 = vsyncpa [#allocation4], 0
    %s12 = scalar_lea.sflag [#allocation4], 1
    %13 = vsyncpa %s12, 0
    loop: start=0, step=1, limit=4
    $region2: #{tpu_custom_call.1} parent=1 // loop_pre_header
      _
    $region3: #{tpu_custom_call.1} parent=1 // loop_header
      %s15 = sphi 0, %s19
      %p16 = scmp.ge.s32.totalorder %s15, 4
      %s23 = sphi 0, %s23
      %s25 = sphi 0, %s23
      %s26 = sphi 0, %s25
      %s40 = sphi 0, %s26
      %s46 = sphi 0, %s48
      %s49 = sphi 0, %s46
      %s50 = sphi 0, %s49
      %s66 = sphi 0, %s50
      %s72 = sphi 0, %s74
      %s75 = sphi 0, %s72
      %s76 = sphi 0, %s75
      %s92 = sphi 0, %s76
    $region4: #{tpu_custom_call.1} parent=1 // loop_header_branch
      %18 = sbr.rel (%p16) target = $region8
    $region5: #{tpu_custom_call.1} parent=1 // loop_body
      %s20 = ssub.s32 %s15, 1
      %s21 = ssub.s32 %s15, 2
      %s22 = sadd.s32 %s15, 1
      %s24 = sadd.s32 %s23, 1
      %p27 = scmp.eq.s32.totalorder %s15, 1
      %p28 = scmp.ne.s32.totalorder %s23, %s25
      %p29 = scmp.eq.s32.totalorder %s15, 0
      %p30 = por %p28, %p29
      %p31 = scmp.ne.s32.totalorder %s23, %s25
      %p32 = scmp.eq.s32.totalorder %s20, 1
      %p33 = por %p31, %p32
      %p34 = scmp.ne.s32.totalorder %s25, %s26
      %p35 = scmp.eq.s32.totalorder %s20, 0
      %p36 = por %p34, %p35
      %p37 = scmp.ne.s32.totalorder %s25, %s26
      %p38 = scmp.eq.s32.totalorder %s21, 1
      %p39 = por %p37, %p38
      %p41 = scmp.ne.s32.totalorder %s26, %s40
      %p42 = scmp.eq.s32.totalorder %s21, 0
      %p43 = por %p41, %p42
      %s44 = ssub.s32 %s15, %s22
      %p45 = scmp.eq.s32.totalorder %s44, 0
      %s47 = sadd.s32 %s46, 1
      %s48 = scalar_select %p45, %s46, %s47
      %p51 = pneg %p45
      %p52 = scmp.eq.s32.totalorder %s15, 1
      %p53 = por %p51, %p52
      %p54 = scmp.ne.s32.totalorder %s46, %s49
      %p55 = scmp.eq.s32.totalorder %s15, 0
      %p56 = por %p54, %p55
      %p57 = scmp.ne.s32.totalorder %s46, %s49
      %p58 = scmp.eq.s32.totalorder %s20, 1
      %p59 = por %p57, %p58
      %p60 = scmp.ne.s32.totalorder %s49, %s50
      %p61 = scmp.eq.s32.totalorder %s20, 0
      %p62 = por %p60, %p61
      %p63 = scmp.ne.s32.totalorder %s49, %s50
      %p64 = scmp.eq.s32.totalorder %s21, 1
      %p65 = por %p63, %p64
      %p67 = scmp.ne.s32.totalorder %s50, %s66
      %p68 = scmp.eq.s32.totalorder %s21, 0
      %p69 = por %p67, %p68
      %s70 = ssub.s32 %s15, %s22
      %p71 = scmp.eq.s32.totalorder %s70, 0
      %s73 = sadd.s32 %s72, 1
      %s74 = scalar_select %p71, %s72, %s73
      %p77 = pneg %p71
      %p78 = scmp.eq.s32.totalorder %s15, 1
      %p79 = por %p77, %p78
      %p80 = scmp.ne.s32.totalorder %s72, %s75
      %p81 = scmp.eq.s32.totalorder %s15, 0
      %p82 = por %p80, %p81
      %p83 = scmp.ne.s32.totalorder %s72, %s75
      %p84 = scmp.eq.s32.totalorder %s20, 1
      %p85 = por %p83, %p84
      %p86 = scmp.ne.s32.totalorder %s75, %s76
      %p87 = scmp.eq.s32.totalorder %s20, 0
      %p88 = por %p86, %p87
      %p89 = scmp.ne.s32.totalorder %s75, %s76
      %p90 = scmp.eq.s32.totalorder %s21, 1
      %p91 = por %p89, %p90
      %p93 = scmp.ne.s32.totalorder %s76, %s92
      %p94 = scmp.eq.s32.totalorder %s21, 0
      %p95 = por %p93, %p94
      %p96 = scmp.le.s32.totalorder 1, %s15
      %p97 = scmp.lt.s32.totalorder %s15, 3
      %p98 = pnand %p96, %p97
      %p99 = pneg %p98
      // Predicated region
      $region9: #{tpu_custom_call.1} parent=5 // pred_check
        _
      $region10: #{tpu_custom_call.1} parent=5 // pred_check_branch
        %101 = sbr.rel (%p98) target = $region12
      $region11: #{tpu_custom_call.1} parent=5 // pred_region
        %s102 = ssub.s32 %s15, 1
        // Predicated region
        $region13: #{tpu_custom_call.1} parent=11 // pred_check
          %p103 = pneg %p36
        $region14: #{tpu_custom_call.1} parent=11 // pred_check_branch
          %105 = sbr.rel (%p103) target = $region16
        $region15: #{tpu_custom_call.1} parent=11 // pred_region
          %s107 = ssub.s32 16, 16
          %108 = vsyncadd [#allocation5], %s107
          %111 = dma.hbm_to_smem %s0, 16, [#allocation2], [#allocation5]
        $region16: #{tpu_custom_call.1} parent=11 // pred_fallthru
          _
      $region12: #{tpu_custom_call.1} parent=5 // pred_fallthru
        _
      %p112 = scmp.lt.s32.totalorder %s15, 2
      // Predicated region
      $region17: #{tpu_custom_call.1} parent=5 // pred_check
        %p113 = pneg %p112
      $region18: #{tpu_custom_call.1} parent=5 // pred_check_branch
        %115 = sbr.rel (%p113) target = $region20
      $region19: #{tpu_custom_call.1} parent=5 // pred_region
        // Predicated region
        $region21: #{tpu_custom_call.1} parent=19 // pred_check
          %p116 = pneg %p56
        $region22: #{tpu_custom_call.1} parent=19 // pred_check_branch
          %118 = sbr.rel (%p116) target = $region24
        $region23: #{tpu_custom_call.1} parent=19 // pred_region
          %s119 = sand.u32 %s46, 1
          %s120 = scalar_lea.sflag [#allocation3], %s119
          %s121 = sand.u32 %s46, 1
          %s122 = smul.addr %s121, 8
          %s123 = scalar_lea.vmem [#allocation6], %s122
          %s125 = ssub.s32 128, 128
          %126 = vsyncadd %s120, %s125
          %s127 = smul.addr %s15, 128
          %s128 = scalar_lea.hbm %s1, %s127
          %s130 = sshll.u32 %s123, 4
          %s131 = int_to_ptr.vmem [resolvable:$true] %s130
          %133 = dma.hbm_to_vmem [thread:$0]  %s128, 128, %s131, %s120
        $region24: #{tpu_custom_call.1} parent=19 // pred_fallthru
          _
      $region20: #{tpu_custom_call.1} parent=5 // pred_fallthru
        _
      %p134 = scmp.le.s32.totalorder 1, %s15
      %p135 = scmp.lt.s32.totalorder %s15, 3
      %p136 = pnand %p134, %p135
      %p137 = pneg %p136
      // Predicated region
      $region25: #{tpu_custom_call.1} parent=5 // pred_check
        _
      $region26: #{tpu_custom_call.1} parent=5 // pred_check_branch
        %139 = sbr.rel (%p136) target = $region28
      $region27: #{tpu_custom_call.1} parent=5 // pred_region
        %s140 = ssub.s32 %s15, 1
        // Predicated region
        $region29: #{tpu_custom_call.1} parent=27 // pred_check
          %p141 = pneg %p36
        $region30: #{tpu_custom_call.1} parent=27 // pred_check_branch
          %143 = sbr.rel (%p141) target = $region32
        $region31: #{tpu_custom_call.1} parent=27 // pred_region
          %144 = dma.done [#allocation5], 16
        $region32: #{tpu_custom_call.1} parent=27 // pred_fallthru
          _
        %s145 = sand.u32 %s49, 1
        %s146 = scalar_lea.sflag [#allocation3], %s145
        %s147 = sand.u32 %s49, 1
        %s148 = smul.addr %s147, 8
        %s149 = scalar_lea.vmem [#allocation6], %s148
        // Predicated region
        $region33: #{tpu_custom_call.1} parent=27 // pred_check
          %p150 = pneg %p62
        $region34: #{tpu_custom_call.1} parent=27 // pred_check_branch
          %152 = sbr.rel (%p150) target = $region36
        $region35: #{tpu_custom_call.1} parent=27 // pred_region
          %153 = dma.done %s146, 128
        $region36: #{tpu_custom_call.1} parent=27 // pred_fallthru
          _
        %154 = sfence
        %p155 = pneg %p36
        %p156 = pneg %p33
        %s157 = sand.u32 %s49, 1
        %s158 = scalar_lea.sflag [#allocation3], %s157
        %s159 = sand.u32 %s49, 1
        %s160 = smul.addr %s159, 8
        %s161 = scalar_lea.vmem [#allocation6], %s160
        %p162 = pneg %p62
        %p163 = pneg %p59
        %p164 = pneg %p88
        %p165 = pneg %p85
        %s166 = sand.u32 %s75, 1
        %s167 = scalar_lea.sflag [#allocation4], %s166
        %s168 = sand.u32 %s75, 1
        %s169 = smul.addr %s168, 8
        %s170 = scalar_lea.vmem [#allocation7], %s169
        %v171 = vld [vmem:[%s149] sm:$0xff]
        %s172 = sld [smem:[#allocation2]]
        %v173 = vstv %s172
        %v174 = vmul.f32 %v171, %v173
        %s175 = sld [smem:[#allocation2 + $0x1]]
        %v176 = vstv %s175
        %v177 = vadd.f32 %v174, %v176
        %178 = vst [vmem:[%s170] sm:$0xff] %v177
        %s179 = sand.u32 %s75, 1
        %s180 = scalar_lea.sflag [#allocation4], %s179
        %s181 = sand.u32 %s75, 1
        %s182 = smul.addr %s181, 8
        %s183 = scalar_lea.vmem [#allocation7], %s182
        // Predicated region
        $region37: #{tpu_custom_call.1} parent=27 // pred_check
          %p184 = pneg %p85
        $region38: #{tpu_custom_call.1} parent=27 // pred_check_branch
          %186 = sbr.rel (%p184) target = $region40
        $region39: #{tpu_custom_call.1} parent=27 // pred_region
          %s188 = ssub.s32 128, 128
          %189 = vsyncadd %s180, %s188
          %s190 = smul.addr %s20, 128
          %s191 = scalar_lea.hbm %s2, %s190
          %s193 = sshll.u32 %s183, 4
          %s194 = int_to_ptr.vmem [resolvable:$true] %s193
          %196 = dma.vmem_to_hbm [thread:$0]  %s194, 128, %s191, %s180
        $region40: #{tpu_custom_call.1} parent=27 // pred_fallthru
          _
      $region28: #{tpu_custom_call.1} parent=5 // pred_fallthru
        _
      %p197 = scmp.le.s32.totalorder 2, %s15
      // Predicated region
      $region41: #{tpu_custom_call.1} parent=5 // pred_check
        %p198 = pneg %p197
      $region42: #{tpu_custom_call.1} parent=5 // pred_check_branch
        %200 = sbr.rel (%p198) target = $region44
      $region43: #{tpu_custom_call.1} parent=5 // pred_region
        %s201 = ssub.s32 %s15, 2
        // Predicated region
        $region45: #{tpu_custom_call.1} parent=43 // pred_check
          %p202 = pneg %p91
        $region46: #{tpu_custom_call.1} parent=43 // pred_check_branch
          %204 = sbr.rel (%p202) target = $region48
        $region47: #{tpu_custom_call.1} parent=43 // pred_region
          %s205 = sand.u32 %s76, 1
          %s206 = scalar_lea.sflag [#allocation4], %s205
          %s207 = sand.u32 %s76, 1
          %s208 = smul.addr %s207, 8
          %s209 = scalar_lea.vmem [#allocation7], %s208
          %210 = dma.done %s206, 128
        $region48: #{tpu_custom_call.1} parent=43 // pred_fallthru
          _
      $region44: #{tpu_custom_call.1} parent=5 // pred_fallthru
        _
    $region6: #{tpu_custom_call.1} parent=1 // loop_footer
      %s19 = sadd.s32 1, %s15
    $region7: #{tpu_custom_call.1} parent=1 // loop_footer_branch
      %14 = sbr.rel target = $region3
    $region8: #{tpu_custom_call.1} parent=1 // loop_exit
      _
    %211 = vsyncpa [#allocation3], 1
    %s212 = scalar_lea.sflag [#allocation3], 1
    %213 = vsyncpa %s212, 1
    %214 = vsyncpa [#allocation4], 1
    %s215 = scalar_lea.sflag [#allocation4], 1
    %216 = vsyncpa %s215, 1
    %217 = vsyncpa [#allocation5], 1
    %s218 = scalar_lea.sflag [#allocation5], 1
    %219 = vsyncpa %s218, 1

</llo_original>
